<compile_context>
chip_gen: v7x
topology: tpu7x:2x2x1
jax: 0.10.0
libtpu: 0.0.40
codegen_flags: <defaults>
</compile_context>

<pallas_src>
import jax
import jax.numpy as jnp
from jax.experimental import pallas as pl
from jax.experimental.pallas import tpu as pltpu


# ----------------------------- kernel ---------------------------------------


def nfp_layer_kernel(adj_ref, x_ref, wc_ref, bc_ref, wl_ref, bl_ref, mem_ref,
                     h_ref, g_ref, acc_ref):
    """Fused NeuralFingerprintConv + per-layer Linear + softmax + SumReadout tile."""
    k = pl.program_id(1)
    nk = pl.num_programs(1)
    tk = adj_ref.shape[1]

    @pl.when(k == 0)
    def _():
        acc_ref[...] = jnp.zeros_like(acc_ref)

    # Message passing with the self term folded in: update = (adj + I) @ x.
    # bf16 x bf16 -> f32 accumulation on the MXU.  x is VMEM-resident
    # (constant index_map); slice the current K chunk in-kernel.
    xk = x_ref[pl.ds(pl.multiple_of(k * tk, tk), tk), :]
    acc_ref[...] += jnp.dot(adj_ref[...], xk, preferred_element_type=jnp.float32)

    @pl.when(k == nk - 1)
    def _():
        # conv combine: Linear + ReLU (bf16 operands, f32 accumulation)
        h = jnp.dot(acc_ref[...].astype(jnp.bfloat16), wc_ref[...],
                    preferred_element_type=jnp.float32) + bc_ref[...]
        h = jnp.maximum(h, 0.0)
        h_bf = h.astype(jnp.bfloat16)
        h_ref[...] = h_bf
        # per-layer head: Linear + softmax(dim=-1).  Padded logit columns carry
        # a -1e30 bias so exp() underflows to exactly 0 there.
        logits = jnp.dot(h_bf, wl_ref[...],
                         preferred_element_type=jnp.float32) + bl_ref[...]
        m = jnp.max(logits, axis=-1, keepdims=True)
        e = jnp.exp(logits - m)
        out = e * pl.reciprocal(jnp.sum(e, axis=-1, keepdims=True), approx=True)
        # fused SumReadout partial for this row tile: (G x tm) @ (tm x O)
        g_ref[...] = jnp.dot(mem_ref[...], out, preferred_element_type=jnp.float32)


# ----------------------------- wrappers -------------------------------------


def _round_up(v, m):
    return (v + m - 1) // m * m


def _pad2(a, rows, cols):
    return jnp.pad(a, ((0, rows - a.shape[0]), (0, cols - a.shape[1])))


def _vmem_limit_bytes():
    # v7x has 64 MiB VMEM per TensorCore -> stay well inside it; v5e/v6e have 128 MiB.
    try:
        kind = jax.devices()[0].device_kind.lower()
    except Exception:
        kind = ""
    return (48 if "v7" in kind else 64) * 1024 * 1024


def nfp_layer(adj_p, x_p, wc_p, bc_p, wl_p, bl_p, mem_p, tm, tk):
    np_ = adj_p.shape[0]
    din = x_p.shape[1]
    hp = wc_p.shape[1]
    op = wl_p.shape[1]
    gp = mem_p.shape[0]
    nrow = np_ // tm
    grid = (nrow, np_ // tk)

    flops = (2 * np_ * np_ * din + 2 * np_ * din * hp
             + 2 * np_ * hp * op + 2 * gp * np_ * op)
    bytes_accessed = (adj_p.size * 2            # bf16 adj, streamed once
                      + x_p.size * 2            # bf16 x, VMEM-resident, read once
                      + wc_p.size * 2 + wl_p.size * 2
                      + bc_p.size * 4 + bl_p.size * 4
                      + mem_p.size * 4
                      + np_ * hp * 2            # bf16 h write
                      + nrow * gp * op * 4)     # per-row-tile readout partials

    h, g_parts = pl.pallas_call(
        nfp_layer_kernel,
        grid_spec=pltpu.PrefetchScalarGridSpec(
            num_scalar_prefetch=0,
            grid=grid,
            in_specs=[
                pl.BlockSpec((tm, tk), lambda i, k: (i, k)),    # adj (+I), bf16 stream
                pl.BlockSpec((np_, din), lambda i, k: (0, 0)),  # x, bf16, VMEM-resident
                pl.BlockSpec((din, hp), lambda i, k: (0, 0)),   # Wc, bf16
                pl.BlockSpec((1, hp), lambda i, k: (0, 0)),     # bc, f32
                pl.BlockSpec((hp, op), lambda i, k: (0, 0)),    # Wl, bf16
                pl.BlockSpec((1, op), lambda i, k: (0, 0)),     # bl, f32
                pl.BlockSpec((gp, tm), lambda i, k: (0, i)),    # membership slice
            ],
            out_specs=[
                pl.BlockSpec((tm, hp), lambda i, k: (i, 0)),    # h (node features, bf16)
                pl.BlockSpec((gp, op), lambda i, k: (i, 0)),    # readout partial per tile
            ],
            scratch_shapes=[
                pltpu.VMEM((tm, din), jnp.float32),             # (adj+I)@x accumulator
            ],
        ),
        out_shape=(
            jax.ShapeDtypeStruct((np_, hp), jnp.bfloat16),
            jax.ShapeDtypeStruct((nrow * gp, op), jnp.float32),
        ),
        compiler_params=pltpu.CompilerParams(
            dimension_semantics=("parallel", "arbitrary"),
            vmem_limit_bytes=_vmem_limit_bytes(),
        ),
        cost_estimate=pl.CostEstimate(
            flops=flops, transcendentals=np_ * op, bytes_accessed=bytes_accessed),
    )(adj_p, x_p, wc_p, bc_p, wl_p, bl_p, mem_p)

    g_layer = jnp.sum(g_parts.reshape(nrow, gp, op), axis=0)
    return h, g_layer


@jax.jit
def neural_fingerprint_forward(adj, mem, x, params):
    """params: list of (Wc, bc, Wl, bl) per layer; Wc:(din,dout), Wl:(dout,odim)."""
    n = x.shape[0]
    g = mem.shape[0]
    out_dim = params[0][3].shape[0]

    # 512 tiles amortize the ~0.35us/grid-step overhead on all generations.
    tm = tk = min(512, _round_up(n, 128))
    np_ = _round_up(n, tm)
    gp = _round_up(g, 8)
    op = _round_up(out_dim, 128)

    # Fold the conv self term into the adjacency: x + adj @ x == (adj + I) @ x.
    # bf16 is exact for the resulting 0/1/2 entries and halves adj HBM/VMEM traffic.
    adj_i = adj.astype(jnp.float32) + jnp.eye(n, dtype=jnp.float32)
    adj_p = _pad2(adj_i, np_, np_).astype(jnp.bfloat16)
    mem_p = _pad2(mem.astype(jnp.float32), gp, np_)

    layer_in = _pad2(x.astype(jnp.float32), np_,
                     _round_up(x.shape[1], 128)).astype(jnp.bfloat16)

    g_sum = None
    h = None
    last_hidden = None
    for (wc, bc, wl, bl) in params:
        din, dout = wc.shape
        dinp = _round_up(din, 128)
        dhp = _round_up(dout, 128)
        wc_p = _pad2(wc.astype(jnp.float32), dinp, dhp).astype(jnp.bfloat16)
        bc_p = jnp.pad(bc.astype(jnp.float32), (0, dhp - dout)).reshape(1, dhp)
        wl_p = _pad2(wl.astype(jnp.float32), dhp, op).astype(jnp.bfloat16)
        bl_p = jnp.pad(bl.astype(jnp.float32), (0, op - out_dim),
                       constant_values=-1e30).reshape(1, op)

        h, g_layer = nfp_layer(adj_p, layer_in, wc_p, bc_p, wl_p, bl_p, mem_p, tm, tk)
        g_sum = g_layer if g_sum is None else g_sum + g_layer
        layer_in = h                              # bf16 activation roundtrip
        last_hidden = dout

    node_feature = h[:n, :last_hidden].astype(jnp.float32)  # concat_hidden=False
    graph_feature = g_sum[:g, :out_dim]                      # SumReadout of output sum
    return {"graph_feature": graph_feature, "node_feature": node_feature}


# ----------------------------- reference ------------------------------------


def reference_forward(adj, mem, x, params):
    hiddens, outputs = [], []
    h = x
    for (wc, bc, wl, bl) in params:
        update = adj @ h
        hid = jax.nn.relu((h + update) @ wc + bc)
        out = jax.nn.softmax(hid @ wl + bl, axis=-1)
        hiddens.append(hid)
        outputs.append(out)
        h = hid
    node_feature = hiddens[-1]
    graph_feature = mem @ sum(outputs)
    return {"graph_feature": graph_feature, "node_feature": node_feature}


# ----------------------------- main -----------------------------------------

if __name__ == "__main__":
    key = jax.random.PRNGKey(0)

    # Small synthetic problem: 2 graphs, 32 total nodes.
    num_nodes = 32
    num_graphs = 2
    input_dim = 16
    hidden_dims = [32, 32]
    output_dim = 16
    dims = [input_dim] + hidden_dims

    keys = jax.random.split(key, 4 + 4 * len(hidden_dims))
    k_x, k_adj = keys[0], keys[1]
    pkeys = keys[4:]

    # node features
    x = jax.random.normal(k_x, (num_nodes, input_dim), dtype=jnp.float32)

    # dense adjacency (edge_weight=1.0 on present edges)
    adj = (jax.random.uniform(k_adj, (num_nodes, num_nodes)) < 0.2).astype(jnp.float32)

    # graph membership: first half of nodes -> graph 0, second half -> graph 1
    node2graph = jnp.concatenate(
        [jnp.zeros(num_nodes // 2, jnp.int32),
         jnp.ones(num_nodes - num_nodes // 2, jnp.int32)])
    mem = (jnp.arange(num_graphs)[:, None] == node2graph[None, :]).astype(jnp.float32)

    # deterministic parameters (PyTorch-style uniform(-1/sqrt(fan_in), 1/sqrt(fan_in)))
    params = []
    for i in range(len(dims) - 1):
        din, dout = dims[i], dims[i + 1]
        kc, kcb, kl, klb = pkeys[4 * i:4 * i + 4]
        bc_bound = 1.0 / jnp.sqrt(din)
        bl_bound = 1.0 / jnp.sqrt(dout)
        wc = jax.random.uniform(kc, (din, dout), jnp.float32, -bc_bound, bc_bound)
        bc = jax.random.uniform(kcb, (dout,), jnp.float32, -bc_bound, bc_bound)
        wl = jax.random.uniform(kl, (dout, output_dim), jnp.float32, -bl_bound, bl_bound)
        bl = jax.random.uniform(klb, (output_dim,), jnp.float32, -bl_bound, bl_bound)
        params.append((wc, bc, wl, bl))

    result = neural_fingerprint_forward(adj, mem, x, params)
    jax.block_until_ready(result)

    ref = reference_forward(adj, mem, x, params)
    # bf16 operands / activations (f32 accumulation) + EUP approx reciprocal in
    # softmax -> tolerances loosened vs. the pure-f32 reference.
    assert jnp.allclose(result["node_feature"], ref["node_feature"], atol=5e-2, rtol=5e-2)
    assert jnp.allclose(result["graph_feature"], ref["graph_feature"], atol=5e-2, rtol=5e-2)
    assert result["node_feature"].shape == (num_nodes, hidden_dims[-1])
    assert result["graph_feature"].shape == (num_graphs, output_dim)

    print("KERNEL_OK")
</pallas_src>

<mosaic_0001>
module attributes {stable_mosaic.version = 11 : i64} {
  func.func @nfp_layer_kernel(%arg0: i32, %arg1: i32, %arg2: memref<128x128xbf16, #tpu.memory_space<vmem>>, %arg3: memref<128x128xbf16, #tpu.memory_space<vmem>>, %arg4: memref<128x128xbf16, #tpu.memory_space<vmem>>, %arg5: memref<1x128xf32, #tpu.memory_space<vmem>>, %arg6: memref<128x128xbf16, #tpu.memory_space<vmem>>, %arg7: memref<1x128xf32, #tpu.memory_space<vmem>>, %arg8: memref<8x128xf32, #tpu.memory_space<vmem>>, %arg9: memref<128x128xbf16, #tpu.memory_space<vmem>>, %arg10: memref<8x128xf32, #tpu.memory_space<vmem>>, %arg11: memref<128x128xf32, #tpu.memory_space<vmem>>) attributes {dimension_semantics = [#tpu.dimension_semantics<parallel>, #tpu.dimension_semantics<arbitrary>], iteration_bounds = array<i64: 1, 1>, scalar_prefetch = 0 : i64, scratch_operands = 1 : i64, tpu.core_type = #tpu.core_type<tc>, window_params = [{transform_indices = @transform_0, window_bounds = array<i64: 128, 128>}, {pipeline_mode = #tpu.pipeline_mode<synchronous>, transform_indices = @transform_1, window_bounds = array<i64: 128, 128>}, {pipeline_mode = #tpu.pipeline_mode<synchronous>, transform_indices = @transform_2, window_bounds = array<i64: 128, 128>}, {pipeline_mode = #tpu.pipeline_mode<synchronous>, transform_indices = @transform_3, window_bounds = array<i64: 1, 128>}, {pipeline_mode = #tpu.pipeline_mode<synchronous>, transform_indices = @transform_4, window_bounds = array<i64: 128, 128>}, {pipeline_mode = #tpu.pipeline_mode<synchronous>, transform_indices = @transform_5, window_bounds = array<i64: 1, 128>}, {transform_indices = @transform_6, window_bounds = array<i64: 8, 128>}, {transform_indices = @transform_7, window_bounds = array<i64: 128, 128>}, {transform_indices = @transform_8, window_bounds = array<i64: 8, 128>}]} {
    %c0_i32 = arith.constant 0 : i32
    %0 = arith.cmpi eq, %arg1, %c0_i32 : i32
    %1 = arith.extui %0 : i1 to i32
    %c0_i32_0 = arith.constant 0 : i32
    %2 = arith.cmpi ne, %1, %c0_i32_0 : i32
    scf.if %2 {
      %cst_9 = arith.constant 0.000000e+00 : f32
      %15 = vector.broadcast %cst_9 : f32 to vector<128x128xf32>
      %c0_10 = arith.constant 0 : index
      %c0_11 = arith.constant 0 : index
      %16 = vector.load %arg11[%c0_10, %c0_11] : memref<128x128xf32, #tpu.memory_space<vmem>>, vector<128x128xf32>
      tpu.vector_store %arg11[%c0_10, %c0_11], %15 {strides = array<i32>} : memref<128x128xf32, #tpu.memory_space<vmem>>, vector<128x128xf32>,
    } else {
    }
    %c128_i32 = arith.constant 128 : i32
    %3 = arith.muli %arg1, %c128_i32 : i32
    %4 = tpu.assume_multiple %3, 128 : i32
    %5 = arith.index_cast %4 : i32 to index
    %c0 = arith.constant 0 : index
    %6 = vector.load %arg3[%5, %c0] : memref<128x128xbf16, #tpu.memory_space<vmem>>, vector<128x128xbf16>
    %c0_1 = arith.constant 0 : index
    %c0_2 = arith.constant 0 : index
    %7 = vector.load %arg11[%c0_1, %c0_2] : memref<128x128xf32, #tpu.memory_space<vmem>>, vector<128x128xf32>
    %c0_3 = arith.constant 0 : index
    %c0_4 = arith.constant 0 : index
    %8 = vector.load %arg2[%c0_3, %c0_4] : memref<128x128xbf16, #tpu.memory_space<vmem>>, vector<128x128xbf16>
    %cst = arith.constant dense<0.000000e+00> : vector<128x128xf32>
    %9 = tpu.matmul %8, %6, %cst {dimension_numbers = #tpu.dot_dimension_numbers<[1], [0], [0], [1], [0, 0, 1, 1], [], []>} : vector<128x128xbf16>, vector<128x128xbf16>, vector<128x128xf32> -> vector<128x128xf32>
    %10 = arith.addf %7, %9 : vector<128x128xf32>
    %c0_5 = arith.constant 0 : index
    %c0_6 = arith.constant 0 : index
    %11 = vector.load %arg11[%c0_5, %c0_6] : memref<128x128xf32, #tpu.memory_space<vmem>>, vector<128x128xf32>
    tpu.vector_store %arg11[%c0_5, %c0_6], %10 {strides = array<i32>} : memref<128x128xf32, #tpu.memory_space<vmem>>, vector<128x128xf32>,
    %c0_i32_7 = arith.constant 0 : i32
    %12 = arith.cmpi eq, %arg1, %c0_i32_7 : i32
    %13 = arith.extui %12 : i1 to i32
    %c0_i32_8 = arith.constant 0 : i32
    %14 = arith.cmpi ne, %13, %c0_i32_8 : i32
    scf.if %14 {
      %c0_9 = arith.constant 0 : index
      %c0_10 = arith.constant 0 : index
      %15 = vector.load %arg11[%c0_9, %c0_10] : memref<128x128xf32, #tpu.memory_space<vmem>>, vector<128x128xf32>
      %16 = arith.truncf %15 : vector<128x128xf32> to vector<128x128xbf16>
      %c0_11 = arith.constant 0 : index
      %c0_12 = arith.constant 0 : index
      %17 = vector.load %arg4[%c0_11, %c0_12] : memref<128x128xbf16, #tpu.memory_space<vmem>>, vector<128x128xbf16>
      %cst_13 = arith.constant dense<0.000000e+00> : vector<128x128xf32>
      %18 = tpu.matmul %16, %17, %cst_13 {dimension_numbers = #tpu.dot_dimension_numbers<[1], [0], [0], [1], [0, 0, 1, 1], [], []>} : vector<128x128xbf16>, vector<128x128xbf16>, vector<128x128xf32> -> vector<128x128xf32>
      %c0_14 = arith.constant 0 : index
      %c0_15 = arith.constant 0 : index
      %19 = vector.load %arg5[%c0_14, %c0_15] : memref<1x128xf32, #tpu.memory_space<vmem>>, vector<1x128xf32>
      %20 = vector.broadcast %19 : vector<1x128xf32> to vector<128x128xf32>
      %21 = arith.addf %18, %20 : vector<128x128xf32>
      %cst_16 = arith.constant 0.000000e+00 : f32
      %22 = vector.broadcast %cst_16 : f32 to vector<128x128xf32>
      %23 = arith.maximumf %21, %22 : vector<128x128xf32>
      %24 = arith.truncf %23 : vector<128x128xf32> to vector<128x128xbf16>
      %c0_17 = arith.constant 0 : index
      %c0_18 = arith.constant 0 : index
      %25 = vector.load %arg9[%c0_17, %c0_18] : memref<128x128xbf16, #tpu.memory_space<vmem>>, vector<128x128xbf16>
      tpu.vector_store %arg9[%c0_17, %c0_18], %24 {strides = array<i32>} : memref<128x128xbf16, #tpu.memory_space<vmem>>, vector<128x128xbf16>,
      %c0_19 = arith.constant 0 : index
      %c0_20 = arith.constant 0 : index
      %26 = vector.load %arg6[%c0_19, %c0_20] : memref<128x128xbf16, #tpu.memory_space<vmem>>, vector<128x128xbf16>
      %cst_21 = arith.constant dense<0.000000e+00> : vector<128x128xf32>
      %27 = tpu.matmul %24, %26, %cst_21 {dimension_numbers = #tpu.dot_dimension_numbers<[1], [0], [0], [1], [0, 0, 1, 1], [], []>} : vector<128x128xbf16>, vector<128x128xbf16>, vector<128x128xf32> -> vector<128x128xf32>
      %c0_22 = arith.constant 0 : index
      %c0_23 = arith.constant 0 : index
      %28 = vector.load %arg7[%c0_22, %c0_23] : memref<1x128xf32, #tpu.memory_space<vmem>>, vector<1x128xf32>
      %29 = vector.broadcast %28 : vector<1x128xf32> to vector<128x128xf32>
      %30 = arith.addf %27, %29 : vector<128x128xf32>
      %cst_24 = arith.constant dense<0xFF800000> : vector<128xf32>
      %31 = vector.multi_reduction <maximumf>, %30, %cst_24 [1] : vector<128x128xf32> to vector<128xf32>
      %32 = vector.shape_cast %31 : vector<128xf32> to vector<128x1xf32>
      %33 = vector.broadcast %32 : vector<128x1xf32> to vector<128x128xf32>
      %34 = arith.subf %30, %33 : vector<128x128xf32>
      %35 = math.exp %34 : vector<128x128xf32>
      %cst_25 = arith.constant dense<0.000000e+00> : vector<128xf32>
      %36 = vector.multi_reduction <add>, %35, %cst_25 [1] : vector<128x128xf32> to vector<128xf32>
      %37 = vector.shape_cast %36 : vector<128xf32> to vector<128x1xf32>
      %38 = tpu.reciprocal %37 {approx = true} : vector<128x1xf32> -> vector<128x1xf32>
      %39 = vector.broadcast %38 : vector<128x1xf32> to vector<128x128xf32>
      %40 = arith.mulf %35, %39 : vector<128x128xf32>
      %c0_26 = arith.constant 0 : index
      %c0_27 = arith.constant 0 : index
      %41 = vector.load %arg8[%c0_26, %c0_27] : memref<8x128xf32, #tpu.memory_space<vmem>>, vector<8x128xf32>
      %cst_28 = arith.constant dense<0.000000e+00> : vector<8x128xf32>
      %42 = tpu.matmul %41, %40, %cst_28 {dimension_numbers = #tpu.dot_dimension_numbers<[1], [0], [0], [1], [0, 0, 1, 1], [], []>} : vector<8x128xf32>, vector<128x128xf32>, vector<8x128xf32> -> vector<8x128xf32>
      %c0_29 = arith.constant 0 : index
      %c0_30 = arith.constant 0 : index
      %43 = vector.load %arg10[%c0_29, %c0_30] : memref<8x128xf32, #tpu.memory_space<vmem>>, vector<8x128xf32>
      tpu.vector_store %arg10[%c0_29, %c0_30], %42 {strides = array<i32>} : memref<8x128xf32, #tpu.memory_space<vmem>>, vector<8x128xf32>,
    } else {
    }
    return
  }
  func.func @transform_0(%arg0: i32, %arg1: i32) -> (i32, i32) {
    %c0_i32 = arith.constant 0 : i32
    return %arg0, %arg1 : i32, i32
  }
  func.func @transform_1(%arg0: i32, %arg1: i32) -> (i32, i32) {
    %c0_i32 = arith.constant 0 : i32
    %c0_i32_0 = arith.constant 0 : i32
    %c0_i32_1 = arith.constant 0 : i32
    return %c0_i32, %c0_i32_0 : i32, i32
  }
  func.func @transform_2(%arg0: i32, %arg1: i32) -> (i32, i32) {
    %c0_i32 = arith.constant 0 : i32
    %c0_i32_0 = arith.constant 0 : i32
    %c0_i32_1 = arith.constant 0 : i32
    return %c0_i32, %c0_i32_0 : i32, i32
  }
  func.func @transform_3(%arg0: i32, %arg1: i32) -> (i32, i32) {
    %c0_i32 = arith.constant 0 : i32
    %c0_i32_0 = arith.constant 0 : i32
    %c0_i32_1 = arith.constant 0 : i32
    return %c0_i32, %c0_i32_0 : i32, i32
  }
  func.func @transform_4(%arg0: i32, %arg1: i32) -> (i32, i32) {
    %c0_i32 = arith.constant 0 : i32
    %c0_i32_0 = arith.constant 0 : i32
    %c0_i32_1 = arith.constant 0 : i32
    return %c0_i32, %c0_i32_0 : i32, i32
  }
  func.func @transform_5(%arg0: i32, %arg1: i32) -> (i32, i32) {
    %c0_i32 = arith.constant 0 : i32
    %c0_i32_0 = arith.constant 0 : i32
    %c0_i32_1 = arith.constant 0 : i32
    return %c0_i32, %c0_i32_0 : i32, i32
  }
  func.func @transform_6(%arg0: i32, %arg1: i32) -> (i32, i32) {
    %c0_i32 = arith.constant 0 : i32
    %c0_i32_0 = arith.constant 0 : i32
    return %c0_i32, %arg0 : i32, i32
  }
  func.func @transform_7(%arg0: i32, %arg1: i32) -> (i32, i32) {
    %c0_i32 = arith.constant 0 : i32
    %c0_i32_0 = arith.constant 0 : i32
    return %arg0, %c0_i32 : i32, i32
  }
  func.func @transform_8(%arg0: i32, %arg1: i32) -> (i32, i32) {
    %c0_i32 = arith.constant 0 : i32
    %c0_i32_0 = arith.constant 0 : i32
    return %arg0, %c0_i32 : i32, i32
  }
}

</mosaic_0001>

<llo_original>
// kernel: neural_fingerprint_forward.2
$region0: #{neural_fingerprint_forward.2}
  #allocation0 [shape = 'u32[]', space=smem, size = 0x4, offset = 0x4, fixed_abs, tag = 'smem constant byte address 0x4 - core index']
  #allocation1 [shape = 'u32[144,128]{1,0:T(1,128)}', space=vmem, size = 0x12000, scoped, tag = 'internal scratch']
  #allocation2 [shape = 'f32[128,128]{1,0:T(8,128)}', space=vmem, size = 0x10000, scoped, tag = 'scratch operand']
  %s0 = inlined_call_operand.hbm [shape: bf16[128,128], index: 0, kind: input, shape index: {}]
  %s1 = inlined_call_operand.hbm [shape: bf16[128,128], index: 1, kind: input, shape index: {}]
  %s2 = inlined_call_operand.hbm [shape: bf16[128,128], index: 2, kind: input, shape index: {}]
  %s3 = inlined_call_operand.hbm [shape: f32[1,128], index: 3, kind: input, shape index: {}]
  %s4 = inlined_call_operand.hbm [shape: bf16[128,128], index: 4, kind: input, shape index: {}]
  %s5 = inlined_call_operand.hbm [shape: f32[1,128], index: 5, kind: input, shape index: {}]
  %s6 = inlined_call_operand.hbm [shape: f32[8,128], index: 6, kind: input, shape index: {}]
  %s7 = inlined_call_operand.hbm [shape: bf16[128,128], index: 7, kind: output, shape index: {0}]
  %s8 = inlined_call_operand.hbm [shape: f32[8,128], index: 8, kind: output, shape index: {1}]
  %9 = xla_tuple %s7, %s8
  %s10 = sld [smem:[#allocation0]]
  $region82: #{neural_fingerprint_forward.2} parent=0
    _
  %s12 = ssub.s32 1, %s10
  %s13 = scalar_select 0, %s12, %s10
  $region1: #{neural_fingerprint_forward.2} parent=0
    #allocation3 [shape = 'u8[32768]{0}', space=vmem, size = 0x8000, scoped, tag = 'input window, operand 0, single buffered']
    #allocation4 [shape = 's32[1]{0}', space=sflag, size = 0x4, scoped, tag = 'scoped memory for neural_fingerprint_forward.2']
    #allocation5 [shape = 's32[1]{0}', space=sflag, size = 0x4, scoped, tag = 'scoped memory for neural_fingerprint_forward.2']
    #allocation6 [shape = 'u8[32768]{0}', space=vmem, size = 0x8000, scoped, tag = 'input window, operand 1, single buffered']
    #allocation7 [shape = 's32[1]{0}', space=sflag, size = 0x4, scoped, tag = 'scoped memory for neural_fingerprint_forward.2']
    #allocation8 [shape = 'u8[32768]{0}', space=vmem, size = 0x8000, scoped, tag = 'input window, operand 2, single buffered']
    #allocation9 [shape = 'u8[512]{0}', space=vmem, size = 0x400, scoped, tag = 'input window, operand 3, single buffered']
    #allocation10 [shape = 's32[1]{0}', space=sflag, size = 0x4, scoped, tag = 'scoped memory for neural_fingerprint_forward.2']
    #allocation11 [shape = 'u8[32768]{0}', space=vmem, size = 0x8000, scoped, tag = 'input window, operand 4, single buffered']
    #allocation12 [shape = 'u8[512]{0}', space=vmem, size = 0x400, scoped, tag = 'input window, operand 5, single buffered']
    #allocation13 [shape = 's32[1]{0}', space=sflag, size = 0x4, scoped, tag = 'scoped memory for neural_fingerprint_forward.2']
    #allocation14 [shape = 'u8[4096]{0}', space=vmem, size = 0x1000, scoped, tag = 'input window, operand 6, single buffered']
    #allocation15 [shape = 'u8[32768]{0}', space=vmem, size = 0x8000, scoped, tag = 'output window, operand 0, single buffered']
    #allocation16 [shape = 'u8[4096]{0}', space=vmem, size = 0x1000, scoped, tag = 'output window, operand 1, single buffered']
    #allocation17 [shape = 's32[1]{0}', space=sflag, size = 0x4, scoped, tag = 'scoped memory for neural_fingerprint_forward.2']
    %14 = vsyncpa [#allocation4], 0
    %15 = vsyncpa [#allocation7], 0
    %16 = vsyncpa [#allocation10], 0
    %17 = vsyncpa [#allocation13], 0
    %18 = vsyncpa [#allocation5], 0
    %19 = vsyncpa [#allocation17], 0
    // Predicated region
    $region2: #{neural_fingerprint_forward.2} parent=1 // pred_check
      _
    $region3: #{neural_fingerprint_forward.2} parent=1 // pred_check_branch
      %21 = sbr.rel (0) target = $region5
    $region4: #{neural_fingerprint_forward.2} parent=1 // pred_region
      %s23 = ssub.s32 1024, 1024
      %24 = vsyncadd [#allocation4], %s23
      %s25 = sshll.u32 [#allocation3], 4
      %s26 = int_to_ptr.vmem [resolvable:$true] %s25
      %31 = dma.hbm_to_vmem [thread:$0]  %s0, 1024, %s26, [#allocation4], 64, 64, 4
    $region5: #{neural_fingerprint_forward.2} parent=1 // pred_fallthru
      _
    // Predicated region
    $region6: #{neural_fingerprint_forward.2} parent=1 // pred_check
      _
    $region7: #{neural_fingerprint_forward.2} parent=1 // pred_check_branch
      %33 = sbr.rel (0) target = $region9
    $region8: #{neural_fingerprint_forward.2} parent=1 // pred_region
      %s35 = ssub.s32 1024, 1024
      %36 = vsyncadd [#allocation7], %s35
      %s37 = sshll.u32 [#allocation6], 4
      %s38 = int_to_ptr.vmem [resolvable:$true] %s37
      %43 = dma.hbm_to_vmem [thread:$0]  %s1, 1024, %s38, [#allocation7], 64, 64, 4
    $region9: #{neural_fingerprint_forward.2} parent=1 // pred_fallthru
      _
    // Predicated region
    $region10: #{neural_fingerprint_forward.2} parent=1 // pred_check
      _
    $region11: #{neural_fingerprint_forward.2} parent=1 // pred_check_branch
      %45 = sbr.rel (0) target = $region13
    $region12: #{neural_fingerprint_forward.2} parent=1 // pred_region
      %s47 = ssub.s32 1024, 1024
      %48 = vsyncadd [#allocation7], %s47
      %s49 = sshll.u32 [#allocation8], 4
      %s50 = int_to_ptr.vmem [resolvable:$true] %s49
      %55 = dma.hbm_to_vmem [thread:$0]  %s2, 1024, %s50, [#allocation7], 64, 64, 4
    $region13: #{neural_fingerprint_forward.2} parent=1 // pred_fallthru
      _
    // Predicated region
    $region14: #{neural_fingerprint_forward.2} parent=1 // pred_check
      _
    $region15: #{neural_fingerprint_forward.2} parent=1 // pred_check_branch
      %57 = sbr.rel (0) target = $region17
    $region16: #{neural_fingerprint_forward.2} parent=1 // pred_region
      %s59 = ssub.s32 16, 16
      %60 = vsyncadd [#allocation10], %s59
      %s62 = sshll.u32 [#allocation9], 4
      %s63 = int_to_ptr.vmem [resolvable:$true] %s62
      %65 = dma.hbm_to_vmem [thread:$0]  %s3, 16, %s63, [#allocation10]
    $region17: #{neural_fingerprint_forward.2} parent=1 // pred_fallthru
      _
    // Predicated region
    $region18: #{neural_fingerprint_forward.2} parent=1 // pred_check
      _
    $region19: #{neural_fingerprint_forward.2} parent=1 // pred_check_branch
      %67 = sbr.rel (0) target = $region21
    $region20: #{neural_fingerprint_forward.2} parent=1 // pred_region
      %s69 = ssub.s32 1024, 1024
      %70 = vsyncadd [#allocation10], %s69
      %s71 = sshll.u32 [#allocation11], 4
      %s72 = int_to_ptr.vmem [resolvable:$true] %s71
      %77 = dma.hbm_to_vmem [thread:$0]  %s4, 1024, %s72, [#allocation10], 64, 64, 4
    $region21: #{neural_fingerprint_forward.2} parent=1 // pred_fallthru
      _
    // Predicated region
    $region22: #{neural_fingerprint_forward.2} parent=1 // pred_check
      _
    $region23: #{neural_fingerprint_forward.2} parent=1 // pred_check_branch
      %79 = sbr.rel (0) target = $region25
    $region24: #{neural_fingerprint_forward.2} parent=1 // pred_region
      %s81 = ssub.s32 16, 16
      %82 = vsyncadd [#allocation13], %s81
      %s84 = sshll.u32 [#allocation12], 4
      %s85 = int_to_ptr.vmem [resolvable:$true] %s84
      %87 = dma.hbm_to_vmem [thread:$0]  %s5, 16, %s85, [#allocation13]
    $region25: #{neural_fingerprint_forward.2} parent=1 // pred_fallthru
      _
    // Predicated region
    $region26: #{neural_fingerprint_forward.2} parent=1 // pred_check
      _
    $region27: #{neural_fingerprint_forward.2} parent=1 // pred_check_branch
      %89 = sbr.rel (0) target = $region29
    $region28: #{neural_fingerprint_forward.2} parent=1 // pred_region
      %s91 = ssub.s32 128, 128
      %92 = vsyncadd [#allocation13], %s91
      %s94 = sshll.u32 [#allocation14], 4
      %s95 = int_to_ptr.vmem [resolvable:$true] %s94
      %97 = dma.hbm_to_vmem [thread:$0]  %s6, 128, %s95, [#allocation13]
    $region29: #{neural_fingerprint_forward.2} parent=1 // pred_fallthru
      _
    // Predicated region
    $region30: #{neural_fingerprint_forward.2} parent=1 // pred_check
      _
    $region31: #{neural_fingerprint_forward.2} parent=1 // pred_check_branch
      %99 = sbr.rel (0) target = $region33
    $region32: #{neural_fingerprint_forward.2} parent=1 // pred_region
      %100 = dma.done [#allocation4], 1024
    $region33: #{neural_fingerprint_forward.2} parent=1 // pred_fallthru
      _
    // Predicated region
    $region34: #{neural_fingerprint_forward.2} parent=1 // pred_check
      _
    $region35: #{neural_fingerprint_forward.2} parent=1 // pred_check_branch
      %102 = sbr.rel (0) target = $region37
    $region36: #{neural_fingerprint_forward.2} parent=1 // pred_region
      %103 = dma.done [#allocation7], 1024
    $region37: #{neural_fingerprint_forward.2} parent=1 // pred_fallthru
      _
    // Predicated region
    $region38: #{neural_fingerprint_forward.2} parent=1 // pred_check
      _
    $region39: #{neural_fingerprint_forward.2} parent=1 // pred_check_branch
      %105 = sbr.rel (0) target = $region41
    $region40: #{neural_fingerprint_forward.2} parent=1 // pred_region
      %106 = dma.done [#allocation7], 1024
    $region41: #{neural_fingerprint_forward.2} parent=1 // pred_fallthru
      _
    // Predicated region
    $region42: #{neural_fingerprint_forward.2} parent=1 // pred_check
      _
    $region43: #{neural_fingerprint_forward.2} parent=1 // pred_check_branch
      %108 = sbr.rel (0) target = $region45
    $region44: #{neural_fingerprint_forward.2} parent=1 // pred_region
      %109 = dma.done [#allocation10], 16
    $region45: #{neural_fingerprint_forward.2} parent=1 // pred_fallthru
      _
    // Predicated region
    $region46: #{neural_fingerprint_forward.2} parent=1 // pred_check
      _
    $region47: #{neural_fingerprint_forward.2} parent=1 // pred_check_branch
      %111 = sbr.rel (0) target = $region49
    $region48: #{neural_fingerprint_forward.2} parent=1 // pred_region
      %112 = dma.done [#allocation10], 1024
    $region49: #{neural_fingerprint_forward.2} parent=1 // pred_fallthru
      _
    // Predicated region
    $region50: #{neural_fingerprint_forward.2} parent=1 // pred_check
      _
    $region51: #{neural_fingerprint_forward.2} parent=1 // pred_check_branch
      %114 = sbr.rel (0) target = $region53
    $region52: #{neural_fingerprint_forward.2} parent=1 // pred_region
      %115 = dma.done [#allocation13], 16
    $region53: #{neural_fingerprint_forward.2} parent=1 // pred_fallthru
      _
    // Predicated region
    $region54: #{neural_fingerprint_forward.2} parent=1 // pred_check
      _
    $region55: #{neural_fingerprint_forward.2} parent=1 // pred_check_branch
      %117 = sbr.rel (0) target = $region57
    $region56: #{neural_fingerprint_forward.2} parent=1 // pred_region
      %118 = dma.done [#allocation13], 128
    $region57: #{neural_fingerprint_forward.2} parent=1 // pred_fallthru
      _
    %p120 = scmp.eq.s32.totalorder 0, 0
    // Predicated region
    $region58: #{neural_fingerprint_forward.2} parent=1 // pred_check
      %p121 = pneg %p120
    $region59: #{neural_fingerprint_forward.2} parent=1 // pred_check_branch
      %123 = sbr.rel (%p121) target = $region61
    $region60: #{neural_fingerprint_forward.2} parent=1 // pred_region
      %124 = vst [vmem:[#allocation2] sm:$0xff] 0.0
      %125 = vst [vmem:[#allocation2 + $0x8] sm:$0xff] 0.0
      %126 = vst [vmem:[#allocation2 + $0x10] sm:$0xff] 0.0
      %127 = vst [vmem:[#allocation2 + $0x18] sm:$0xff] 0.0
      %128 = vst [vmem:[#allocation2 + $0x20] sm:$0xff] 0.0
      %129 = vst [vmem:[#allocation2 + $0x28] sm:$0xff] 0.0
      %130 = vst [vmem:[#allocation2 + $0x30] sm:$0xff] 0.0
      %131 = vst [vmem:[#allocation2 + $0x38] sm:$0xff] 0.0
      %132 = vst [vmem:[#allocation2 + $0x40] sm:$0xff] 0.0
      %133 = vst [vmem:[#allocation2 + $0x48] sm:$0xff] 0.0
      %134 = vst [vmem:[#allocation2 + $0x50] sm:$0xff] 0.0
      %135 = vst [vmem:[#allocation2 + $0x58] sm:$0xff] 0.0
      %136 = vst [vmem:[#allocation2 + $0x60] sm:$0xff] 0.0
      %137 = vst [vmem:[#allocation2 + $0x68] sm:$0xff] 0.0
      %138 = vst [vmem:[#allocation2 + $0x70] sm:$0xff] 0.0
      %139 = vst [vmem:[#allocation2 + $0x78] sm:$0xff] 0.0
    $region61: #{neural_fingerprint_forward.2} parent=1 // pred_fallthru
      _
    %s140 = smul.u32 0, 128
    %s141 = sshra.s32 %s140, 3
    %s142 = sand.u32 %s140, 7
    %s143 = smul.addr %s141, 4
    %s144 = scalar_lea.vmem [#allocation6], %s143
    %v145 = vld [vmem:[%s144] sm:$0xf]
    %v146 = vld [vmem:[%s144 + $0x4] sm:$0xf]
    %v147 = vld [vmem:[%s144 + $0x8] sm:$0xf]
    %v148 = vld [vmem:[%s144 + $0xc] sm:$0xf]
    %v149 = vld [vmem:[%s144 + $0x10] sm:$0xf]
    %v150 = vld [vmem:[%s144 + $0x14] sm:$0xf]
    %v151 = vld [vmem:[%s144 + $0x18] sm:$0xf]
    %v152 = vld [vmem:[%s144 + $0x1c] sm:$0xf]
    %v153 = vld [vmem:[%s144 + $0x20] sm:$0xf]
    %v154 = vld [vmem:[%s144 + $0x24] sm:$0xf]
    %v155 = vld [vmem:[%s144 + $0x28] sm:$0xf]
    %v156 = vld [vmem:[%s144 + $0x2c] sm:$0xf]
    %v157 = vld [vmem:[%s144 + $0x30] sm:$0xf]
    %v158 = vld [vmem:[%s144 + $0x34] sm:$0xf]
    %v159 = vld [vmem:[%s144 + $0x38] sm:$0xf]
    %v160 = vld [vmem:[%s144 + $0x3c] sm:$0xf]
    %v161 = vld [vmem:[#allocation2] sm:$0xff]
    %v162 = vld [vmem:[#allocation2 + $0x8] sm:$0xff]
    %v163 = vld [vmem:[#allocation2 + $0x10] sm:$0xff]
    %v164 = vld [vmem:[#allocation2 + $0x18] sm:$0xff]
    %v165 = vld [vmem:[#allocation2 + $0x20] sm:$0xff]
    %v166 = vld [vmem:[#allocation2 + $0x28] sm:$0xff]
    %v167 = vld [vmem:[#allocation2 + $0x30] sm:$0xff]
    %v168 = vld [vmem:[#allocation2 + $0x38] sm:$0xff]
    %v169 = vld [vmem:[#allocation2 + $0x40] sm:$0xff]
    %v170 = vld [vmem:[#allocation2 + $0x48] sm:$0xff]
    %v171 = vld [vmem:[#allocation2 + $0x50] sm:$0xff]
    %v172 = vld [vmem:[#allocation2 + $0x58] sm:$0xff]
    %v173 = vld [vmem:[#allocation2 + $0x60] sm:$0xff]
    %v174 = vld [vmem:[#allocation2 + $0x68] sm:$0xff]
    %v175 = vld [vmem:[#allocation2 + $0x70] sm:$0xff]
    %v176 = vld [vmem:[#allocation2 + $0x78] sm:$0xff]
    %v177 = vld [vmem:[#allocation3] sm:$0xf]
    %v178 = vld [vmem:[#allocation3 + $0x4] sm:$0xf]
    %v179 = vld [vmem:[#allocation3 + $0x8] sm:$0xf]
    %v180 = vld [vmem:[#allocation3 + $0xc] sm:$0xf]
    %v181 = vld [vmem:[#allocation3 + $0x10] sm:$0xf]
    %v182 = vld [vmem:[#allocation3 + $0x14] sm:$0xf]
    %v183 = vld [vmem:[#allocation3 + $0x18] sm:$0xf]
    %v184 = vld [vmem:[#allocation3 + $0x1c] sm:$0xf]
    %v185 = vld [vmem:[#allocation3 + $0x20] sm:$0xf]
    %v186 = vld [vmem:[#allocation3 + $0x24] sm:$0xf]
    %v187 = vld [vmem:[#allocation3 + $0x28] sm:$0xf]
    %v188 = vld [vmem:[#allocation3 + $0x2c] sm:$0xf]
    %v189 = vld [vmem:[#allocation3 + $0x30] sm:$0xf]
    %v190 = vld [vmem:[#allocation3 + $0x34] sm:$0xf]
    %v191 = vld [vmem:[#allocation3 + $0x38] sm:$0xf]
    %v192 = vld [vmem:[#allocation3 + $0x3c] sm:$0xf]
    %v209 = vunpack.c.l.b16 %v177
    %v210 = vunpack.c.l.b16 %v178
    %v211 = vunpack.c.l.b16 %v179
    %v212 = vunpack.c.l.b16 %v180
    %v213 = vunpack.c.l.b16 %v181
    %v214 = vunpack.c.l.b16 %v182
    %v215 = vunpack.c.l.b16 %v183
    %v216 = vunpack.c.l.b16 %v184
    %v217 = vunpack.c.l.b16 %v185
    %v218 = vunpack.c.l.b16 %v186
    %v219 = vunpack.c.l.b16 %v187
    %v220 = vunpack.c.l.b16 %v188
    %v221 = vunpack.c.l.b16 %v189
    %v222 = vunpack.c.l.b16 %v190
    %v223 = vunpack.c.l.b16 %v191
    %v224 = vunpack.c.l.b16 %v192
    %v225 = vpack.c.b16 %v210, %v209
    %v226 = vpack.c.b16 %v212, %v211
    %v227 = vpack.c.b16 %v214, %v213
    %v228 = vpack.c.b16 %v216, %v215
    %v229 = vpack.c.b16 %v218, %v217
    %v230 = vpack.c.b16 %v220, %v219
    %v231 = vpack.c.b16 %v222, %v221
    %v232 = vpack.c.b16 %v224, %v223
    %v257 = vunpack.c.l.b16 %v145
    %v258 = vunpack.c.l.b16 %v146
    %v259 = vunpack.c.l.b16 %v147
    %v260 = vunpack.c.l.b16 %v148
    %v261 = vunpack.c.l.b16 %v149
    %v262 = vunpack.c.l.b16 %v150
    %v263 = vunpack.c.l.b16 %v151
    %v264 = vunpack.c.l.b16 %v152
    %v265 = vunpack.c.l.b16 %v153
    %v266 = vunpack.c.l.b16 %v154
    %v267 = vunpack.c.l.b16 %v155
    %v268 = vunpack.c.l.b16 %v156
    %v269 = vunpack.c.l.b16 %v157
    %v270 = vunpack.c.l.b16 %v158
    %v271 = vunpack.c.l.b16 %v159
    %v272 = vunpack.c.l.b16 %v160
    %v273 = vpack.c.b16 %v258, %v257
    %v274 = vpack.c.b16 %v260, %v259
    %v275 = vpack.c.b16 %v262, %v261
    %v276 = vpack.c.b16 %v264, %v263
    %v277 = vpack.c.b16 %v266, %v265
    %v278 = vpack.c.b16 %v268, %v267
    %v279 = vpack.c.b16 %v270, %v269
    %v280 = vpack.c.b16 %v272, %v271
    %289 = vmatprep.subr.bf16.mxu0 0
    %290 = vmatpush1.bf16.msra.mxu0 %v273
    %291 = vmatprep.subr.bf16.mxu0 0
    %292 = vmatpush1.bf16.msra.mxu0 %v274
    %293 = vmatprep.subr.bf16.mxu0 0
    %294 = vmatpush1.bf16.msra.mxu0 %v275
    %295 = vmatprep.subr.bf16.mxu0 0
    %296 = vmatpush1.bf16.msra.mxu0 %v276
    %297 = vmatprep.subr.bf16.mxu0 0
    %298 = vmatpush1.bf16.msra.mxu0 %v277
    %299 = vmatprep.subr.bf16.mxu0 0
    %300 = vmatpush1.bf16.msra.mxu0 %v278
    %301 = vmatprep.subr.bf16.mxu0 0
    %302 = vmatpush1.bf16.msra.mxu0 %v279
    %303 = vmatprep.subr.bf16.mxu0 0
    %304 = vmatpush1.bf16.msra.mxu0 %v280
    %305 = vmatprep.subr.bf16.mxu0 0
    %306 = vmatpush1.bf16.msra.mxu0 0
    %307 = vmatprep.subr.bf16.mxu0 0
    %308 = vmatpush1.bf16.msra.mxu0 0
    %309 = vmatprep.subr.bf16.mxu0 0
    %310 = vmatpush1.bf16.msra.mxu0 0
    %311 = vmatprep.subr.bf16.mxu0 0
    %312 = vmatpush1.bf16.msra.mxu0 0
    %313 = vmatprep.subr.bf16.mxu0 0
    %314 = vmatpush1.bf16.msra.mxu0 0
    %315 = vmatprep.subr.bf16.mxu0 0
    %316 = vmatpush1.bf16.msra.mxu0 0
    %317 = vmatprep.subr.bf16.mxu0 0
    %318 = vmatpush1.bf16.msra.mxu0 0
    %319 = vmatprep.subr.bf16.mxu0 0
    %320 = vmatpush1.bf16.msra.mxu0 0
    %321 = vmatprep.mubr.bf16.mxu0 0
    %322 = vmatmul.mubr.bf16.gmra.mrb[0].mxu0 %v225
    %v323 = vpop.f32.mrb[0].mxu0
    %v324 = vadd.f32 0.0, %v323
    %v325 = vpop.f32.mrb[0].mxu0
    %v326 = vpop.f32.mrb[0].mxu0
    %v327 = vadd.f32 0.0, %v326
    %v328 = vpop.f32.mrb[0].mxu0
    %329 = vmatprep.mubr.bf16.mxu0 0
    %330 = vmatmul.mubr.bf16.gmra.mrb[0].mxu0 %v226
    %v331 = vpop.f32.mrb[0].mxu0
    %v332 = vadd.f32 0.0, %v331
    %v333 = vpop.f32.mrb[0].mxu0
    %v334 = vpop.f32.mrb[0].mxu0
    %v335 = vadd.f32 0.0, %v334
    %v336 = vpop.f32.mrb[0].mxu0
    %337 = vmatprep.mubr.bf16.mxu0 0
    %338 = vmatmul.mubr.bf16.gmra.mrb[0].mxu0 %v227
    %v339 = vpop.f32.mrb[0].mxu0
    %v340 = vadd.f32 0.0, %v339
    %v341 = vpop.f32.mrb[0].mxu0
    %v342 = vpop.f32.mrb[0].mxu0
    %v343 = vadd.f32 0.0, %v342
    %v344 = vpop.f32.mrb[0].mxu0
    %345 = vmatprep.mubr.bf16.mxu0 0
    %346 = vmatmul.mubr.bf16.gmra.mrb[0].mxu0 %v228
    %v347 = vpop.f32.mrb[0].mxu0
    %v348 = vadd.f32 0.0, %v347
    %v349 = vpop.f32.mrb[0].mxu0
    %v350 = vpop.f32.mrb[0].mxu0
    %v351 = vadd.f32 0.0, %v350
    %v352 = vpop.f32.mrb[0].mxu0
    %353 = vmatprep.mubr.bf16.mxu0 0
    %354 = vmatmul.mubr.bf16.gmra.mrb[0].mxu0 %v229
    %v355 = vpop.f32.mrb[0].mxu0
    %v356 = vadd.f32 0.0, %v355
    %v357 = vpop.f32.mrb[0].mxu0
    %v358 = vpop.f32.mrb[0].mxu0
    %v359 = vadd.f32 0.0, %v358
    %v360 = vpop.f32.mrb[0].mxu0
    %361 = vmatprep.mubr.bf16.mxu0 0
    %362 = vmatmul.mubr.bf16.gmra.mrb[0].mxu0 %v230
    %v363 = vpop.f32.mrb[0].mxu0
    %v364 = vadd.f32 0.0, %v363
    %v365 = vpop.f32.mrb[0].mxu0
    %v366 = vpop.f32.mrb[0].mxu0
    %v367 = vadd.f32 0.0, %v366
    %v368 = vpop.f32.mrb[0].mxu0
    %369 = vmatprep.mubr.bf16.mxu0 0
    %370 = vmatmul.mubr.bf16.gmra.mrb[0].mxu0 %v231
    %v371 = vpop.f32.mrb[0].mxu0
    %v372 = vadd.f32 0.0, %v371
    %v373 = vpop.f32.mrb[0].mxu0
    %v374 = vpop.f32.mrb[0].mxu0
    %v375 = vadd.f32 0.0, %v374
    %v376 = vpop.f32.mrb[0].mxu0
    %377 = vmatprep.mubr.bf16.mxu0 0
    %378 = vmatmul.mubr.bf16.gmra.mrb[0].mxu0 %v232
    %v379 = vpop.f32.mrb[0].mxu0
    %v380 = vadd.f32 0.0, %v379
    %v381 = vpop.f32.mrb[0].mxu0
    %v382 = vpop.f32.mrb[0].mxu0
    %v383 = vadd.f32 0.0, %v382
    %v384 = vpop.f32.mrb[0].mxu0
    %385 = vdwg.mxu0
    %v386 = vadd.f32 %v161, %v324
    %v387 = vadd.f32 %v162, %v327
    %v388 = vadd.f32 %v163, %v332
    %v389 = vadd.f32 %v164, %v335
    %v390 = vadd.f32 %v165, %v340
    %v391 = vadd.f32 %v166, %v343
    %v392 = vadd.f32 %v167, %v348
    %v393 = vadd.f32 %v168, %v351
    %v394 = vadd.f32 %v169, %v356
    %v395 = vadd.f32 %v170, %v359
    %v396 = vadd.f32 %v171, %v364
    %v397 = vadd.f32 %v172, %v367
    %v398 = vadd.f32 %v173, %v372
    %v399 = vadd.f32 %v174, %v375
    %v400 = vadd.f32 %v175, %v380
    %v401 = vadd.f32 %v176, %v383
    %402 = vst [vmem:[#allocation2] sm:$0xff] %v386
    %403 = vst [vmem:[#allocation2 + $0x8] sm:$0xff] %v387
    %404 = vst [vmem:[#allocation2 + $0x10] sm:$0xff] %v388
    %405 = vst [vmem:[#allocation2 + $0x18] sm:$0xff] %v389
    %406 = vst [vmem:[#allocation2 + $0x20] sm:$0xff] %v390
    %407 = vst [vmem:[#allocation2 + $0x28] sm:$0xff] %v391
    %408 = vst [vmem:[#allocation2 + $0x30] sm:$0xff] %v392
    %409 = vst [vmem:[#allocation2 + $0x38] sm:$0xff] %v393
    %410 = vst [vmem:[#allocation2 + $0x40] sm:$0xff] %v394
    %411 = vst [vmem:[#allocation2 + $0x48] sm:$0xff] %v395
    %412 = vst [vmem:[#allocation2 + $0x50] sm:$0xff] %v396
    %413 = vst [vmem:[#allocation2 + $0x58] sm:$0xff] %v397
    %414 = vst [vmem:[#allocation2 + $0x60] sm:$0xff] %v398
    %415 = vst [vmem:[#allocation2 + $0x68] sm:$0xff] %v399
    %416 = vst [vmem:[#allocation2 + $0x70] sm:$0xff] %v400
    %417 = vst [vmem:[#allocation2 + $0x78] sm:$0xff] %v401
    // Predicated region
    $region62: #{neural_fingerprint_forward.2} parent=1 // pred_check
      %p418 = pneg %p120
    $region63: #{neural_fingerprint_forward.2} parent=1 // pred_check_branch
      %420 = sbr.rel (%p418) target = $region65
    $region64: #{neural_fingerprint_forward.2} parent=1 // pred_region
      %v421 = vld [vmem:[#allocation2] sm:$0xff]
      %v422 = vld [vmem:[#allocation2 + $0x8] sm:$0xff]
      %v423 = vld [vmem:[#allocation2 + $0x10] sm:$0xff]
      %v424 = vld [vmem:[#allocation2 + $0x18] sm:$0xff]
      %v425 = vld [vmem:[#allocation2 + $0x20] sm:$0xff]
      %v426 = vld [vmem:[#allocation2 + $0x28] sm:$0xff]
      %v427 = vld [vmem:[#allocation2 + $0x30] sm:$0xff]
      %v428 = vld [vmem:[#allocation2 + $0x38] sm:$0xff]
      %v429 = vld [vmem:[#allocation2 + $0x40] sm:$0xff]
      %v430 = vld [vmem:[#allocation2 + $0x48] sm:$0xff]
      %v431 = vld [vmem:[#allocation2 + $0x50] sm:$0xff]
      %v432 = vld [vmem:[#allocation2 + $0x58] sm:$0xff]
      %v433 = vld [vmem:[#allocation2 + $0x60] sm:$0xff]
      %v434 = vld [vmem:[#allocation2 + $0x68] sm:$0xff]
      %v435 = vld [vmem:[#allocation2 + $0x70] sm:$0xff]
      %v436 = vld [vmem:[#allocation2 + $0x78] sm:$0xff]
      %v437 = vpack.c.bf16 %v422, %v421
      %v438 = vpack.c.bf16 %v424, %v423
      %v439 = vpack.c.bf16 %v426, %v425
      %v440 = vpack.c.bf16 %v428, %v427
      %v441 = vpack.c.bf16 %v430, %v429
      %v442 = vpack.c.bf16 %v432, %v431
      %v443 = vpack.c.bf16 %v434, %v433
      %v444 = vpack.c.bf16 %v436, %v435
      %v445 = vld [vmem:[#allocation8] sm:$0xf]
      %v446 = vld [vmem:[#allocation8 + $0x4] sm:$0xf]
      %v447 = vld [vmem:[#allocation8 + $0x8] sm:$0xf]
      %v448 = vld [vmem:[#allocation8 + $0xc] sm:$0xf]
      %v449 = vld [vmem:[#allocation8 + $0x10] sm:$0xf]
      %v450 = vld [vmem:[#allocation8 + $0x14] sm:$0xf]
      %v451 = vld [vmem:[#allocation8 + $0x18] sm:$0xf]
      %v452 = vld [vmem:[#allocation8 + $0x1c] sm:$0xf]
      %v453 = vld [vmem:[#allocation8 + $0x20] sm:$0xf]
      %v454 = vld [vmem:[#allocation8 + $0x24] sm:$0xf]
      %v455 = vld [vmem:[#allocation8 + $0x28] sm:$0xf]
      %v456 = vld [vmem:[#allocation8 + $0x2c] sm:$0xf]
      %v457 = vld [vmem:[#allocation8 + $0x30] sm:$0xf]
      %v458 = vld [vmem:[#allocation8 + $0x34] sm:$0xf]
      %v459 = vld [vmem:[#allocation8 + $0x38] sm:$0xf]
      %v460 = vld [vmem:[#allocation8 + $0x3c] sm:$0xf]
      %v461 = vld [vmem:[#allocation9] sm:$0x1]
      %v463 = vlaneseq
      %v464 = vshrl.u32 %v463, 7
      %v465 = vsub.s32 0, %v464
      %v466 = vrot.slane %v461, %v465
      %v484 = vunpack.c.l.b16 %v445
      %v485 = vunpack.c.l.b16 %v446
      %v486 = vunpack.c.l.b16 %v447
      %v487 = vunpack.c.l.b16 %v448
      %v488 = vunpack.c.l.b16 %v449
      %v489 = vunpack.c.l.b16 %v450
      %v490 = vunpack.c.l.b16 %v451
      %v491 = vunpack.c.l.b16 %v452
      %v492 = vunpack.c.l.b16 %v453
      %v493 = vunpack.c.l.b16 %v454
      %v494 = vunpack.c.l.b16 %v455
      %v495 = vunpack.c.l.b16 %v456
      %v496 = vunpack.c.l.b16 %v457
      %v497 = vunpack.c.l.b16 %v458
      %v498 = vunpack.c.l.b16 %v459
      %v499 = vunpack.c.l.b16 %v460
      %v500 = vpack.c.b16 %v485, %v484
      %v501 = vpack.c.b16 %v487, %v486
      %v502 = vpack.c.b16 %v489, %v488
      %v503 = vpack.c.b16 %v491, %v490
      %v504 = vpack.c.b16 %v493, %v492
      %v505 = vpack.c.b16 %v495, %v494
      %v506 = vpack.c.b16 %v497, %v496
      %v507 = vpack.c.b16 %v499, %v498
      %516 = vmatprep.subr.bf16.mxu0 0
      %517 = vmatpush1.bf16.msra.mxu0 %v500
      %518 = vmatprep.subr.bf16.mxu0 0
      %519 = vmatpush1.bf16.msra.mxu0 %v501
      %520 = vmatprep.subr.bf16.mxu0 0
      %521 = vmatpush1.bf16.msra.mxu0 %v502
      %522 = vmatprep.subr.bf16.mxu0 0
      %523 = vmatpush1.bf16.msra.mxu0 %v503
      %524 = vmatprep.subr.bf16.mxu0 0
      %525 = vmatpush1.bf16.msra.mxu0 %v504
      %526 = vmatprep.subr.bf16.mxu0 0
      %527 = vmatpush1.bf16.msra.mxu0 %v505
      %528 = vmatprep.subr.bf16.mxu0 0
      %529 = vmatpush1.bf16.msra.mxu0 %v506
      %530 = vmatprep.subr.bf16.mxu0 0
      %531 = vmatpush1.bf16.msra.mxu0 %v507
      %532 = vmatprep.subr.bf16.mxu0 0
      %533 = vmatpush1.bf16.msra.mxu0 0
      %534 = vmatprep.subr.bf16.mxu0 0
      %535 = vmatpush1.bf16.msra.mxu0 0
      %536 = vmatprep.subr.bf16.mxu0 0
      %537 = vmatpush1.bf16.msra.mxu0 0
      %538 = vmatprep.subr.bf16.mxu0 0
      %539 = vmatpush1.bf16.msra.mxu0 0
      %540 = vmatprep.subr.bf16.mxu0 0
      %541 = vmatpush1.bf16.msra.mxu0 0
      %542 = vmatprep.subr.bf16.mxu0 0
      %543 = vmatpush1.bf16.msra.mxu0 0
      %544 = vmatprep.subr.bf16.mxu0 0
      %545 = vmatpush1.bf16.msra.mxu0 0
      %546 = vmatprep.subr.bf16.mxu0 0
      %547 = vmatpush1.bf16.msra.mxu0 0
      %548 = vmatprep.mubr.bf16.mxu0 0
      %549 = vmatmul.mubr.bf16.gmra.mrb[0].mxu0 %v437
      %v550 = vpop.f32.mrb[0].mxu0
      %v551 = vadd.f32 %v466, %v550
      %v552 = vpop.f32.mrb[0].mxu0
      %v553 = vpop.f32.mrb[0].mxu0
      %v554 = vadd.f32 %v466, %v553
      %v555 = vpop.f32.mrb[0].mxu0
      %556 = vmatprep.mubr.bf16.mxu0 0
      %557 = vmatmul.mubr.bf16.gmra.mrb[0].mxu0 %v438
      %v558 = vpop.f32.mrb[0].mxu0
      %v559 = vadd.f32 %v466, %v558
      %v560 = vpop.f32.mrb[0].mxu0
      %v561 = vpop.f32.mrb[0].mxu0
      %v562 = vadd.f32 %v466, %v561
      %v563 = vpop.f32.mrb[0].mxu0
      %564 = vmatprep.mubr.bf16.mxu0 0
      %565 = vmatmul.mubr.bf16.gmra.mrb[0].mxu0 %v439
      %v566 = vpop.f32.mrb[0].mxu0
      %v567 = vadd.f32 %v466, %v566
      %v568 = vpop.f32.mrb[0].mxu0
      %v569 = vpop.f32.mrb[0].mxu0
      %v570 = vadd.f32 %v466, %v569
      %v571 = vpop.f32.mrb[0].mxu0
      %572 = vmatprep.mubr.bf16.mxu0 0
      %573 = vmatmul.mubr.bf16.gmra.mrb[0].mxu0 %v440
      %v574 = vpop.f32.mrb[0].mxu0
      %v575 = vadd.f32 %v466, %v574
      %v576 = vpop.f32.mrb[0].mxu0
      %v577 = vpop.f32.mrb[0].mxu0
      %v578 = vadd.f32 %v466, %v577
      %v579 = vpop.f32.mrb[0].mxu0
      %580 = vmatprep.mubr.bf16.mxu0 0
      %581 = vmatmul.mubr.bf16.gmra.mrb[0].mxu0 %v441
      %v582 = vpop.f32.mrb[0].mxu0
      %v583 = vadd.f32 %v466, %v582
      %v584 = vpop.f32.mrb[0].mxu0
      %v585 = vpop.f32.mrb[0].mxu0
      %v586 = vadd.f32 %v466, %v585
      %v587 = vpop.f32.mrb[0].mxu0
      %588 = vmatprep.mubr.bf16.mxu0 0
      %589 = vmatmul.mubr.bf16.gmra.mrb[0].mxu0 %v442
      %v590 = vpop.f32.mrb[0].mxu0
      %v591 = vadd.f32 %v466, %v590
      %v592 = vpop.f32.mrb[0].mxu0
      %v593 = vpop.f32.mrb[0].mxu0
      %v594 = vadd.f32 %v466, %v593
      %v595 = vpop.f32.mrb[0].mxu0
      %596 = vmatprep.mubr.bf16.mxu0 0
      %597 = vmatmul.mubr.bf16.gmra.mrb[0].mxu0 %v443
      %v598 = vpop.f32.mrb[0].mxu0
      %v599 = vadd.f32 %v466, %v598
      %v600 = vpop.f32.mrb[0].mxu0
      %v601 = vpop.f32.mrb[0].mxu0
      %v602 = vadd.f32 %v466, %v601
      %v603 = vpop.f32.mrb[0].mxu0
      %604 = vmatprep.mubr.bf16.mxu0 0
      %605 = vmatmul.mubr.bf16.gmra.mrb[0].mxu0 %v444
      %v606 = vpop.f32.mrb[0].mxu0
      %v607 = vadd.f32 %v466, %v606
      %v608 = vpop.f32.mrb[0].mxu0
      %v609 = vpop.f32.mrb[0].mxu0
      %v610 = vadd.f32 %v466, %v609
      %v611 = vpop.f32.mrb[0].mxu0
      %612 = vdwg.mxu0
      %v613 = vmax.f32 %v551, 0.0
      %v614 = vmax.f32 %v554, 0.0
      %v615 = vmax.f32 %v559, 0.0
      %v616 = vmax.f32 %v562, 0.0
      %v617 = vmax.f32 %v567, 0.0
      %v618 = vmax.f32 %v570, 0.0
      %v619 = vmax.f32 %v575, 0.0
      %v620 = vmax.f32 %v578, 0.0
      %v621 = vmax.f32 %v583, 0.0
      %v622 = vmax.f32 %v586, 0.0
      %v623 = vmax.f32 %v591, 0.0
      %v624 = vmax.f32 %v594, 0.0
      %v625 = vmax.f32 %v599, 0.0
      %v626 = vmax.f32 %v602, 0.0
      %v627 = vmax.f32 %v607, 0.0
      %v628 = vmax.f32 %v610, 0.0
      %v629 = vpack.c.bf16 %v614, %v613
      %v630 = vpack.c.bf16 %v616, %v615
      %v631 = vpack.c.bf16 %v618, %v617
      %v632 = vpack.c.bf16 %v620, %v619
      %v633 = vpack.c.bf16 %v622, %v621
      %v634 = vpack.c.bf16 %v624, %v623
      %v635 = vpack.c.bf16 %v626, %v625
      %v636 = vpack.c.bf16 %v628, %v627
      %v645 = vunpack.c.l.b16 %v629
      %v646 = vunpack.c.h.b16 %v629
      %v647 = vunpack.c.l.b16 %v630
      %v648 = vunpack.c.h.b16 %v630
      %v649 = vunpack.c.l.b16 %v631
      %v650 = vunpack.c.h.b16 %v631
      %v651 = vunpack.c.l.b16 %v632
      %v652 = vunpack.c.h.b16 %v632
      %v653 = vunpack.c.l.b16 %v633
      %v654 = vunpack.c.h.b16 %v633
      %v655 = vunpack.c.l.b16 %v634
      %v656 = vunpack.c.h.b16 %v634
      %v657 = vunpack.c.l.b16 %v635
      %v658 = vunpack.c.h.b16 %v635
      %v659 = vunpack.c.l.b16 %v636
      %v660 = vunpack.c.h.b16 %v636
      %v661 = vpack.c.b16 %v645, %v645
      %v662 = vpack.c.b16 %v646, %v646
      %v663 = vpack.c.b16 %v647, %v647
      %v664 = vpack.c.b16 %v648, %v648
      %v665 = vpack.c.b16 %v649, %v649
      %v666 = vpack.c.b16 %v650, %v650
      %v667 = vpack.c.b16 %v651, %v651
      %v668 = vpack.c.b16 %v652, %v652
      %v669 = vpack.c.b16 %v653, %v653
      %v670 = vpack.c.b16 %v654, %v654
      %v671 = vpack.c.b16 %v655, %v655
      %v672 = vpack.c.b16 %v656, %v656
      %v673 = vpack.c.b16 %v657, %v657
      %v674 = vpack.c.b16 %v658, %v658
      %v675 = vpack.c.b16 %v659, %v659
      %v676 = vpack.c.b16 %v660, %v660
      %693 = vst [vmem:[#allocation15] sm:$0xf] %v661
      %694 = vst [vmem:[#allocation15 + $0x4] sm:$0xf] %v662
      %695 = vst [vmem:[#allocation15 + $0x8] sm:$0xf] %v663
      %696 = vst [vmem:[#allocation15 + $0xc] sm:$0xf] %v664
      %697 = vst [vmem:[#allocation15 + $0x10] sm:$0xf] %v665
      %698 = vst [vmem:[#allocation15 + $0x14] sm:$0xf] %v666
      %699 = vst [vmem:[#allocation15 + $0x18] sm:$0xf] %v667
      %700 = vst [vmem:[#allocation15 + $0x1c] sm:$0xf] %v668
      %701 = vst [vmem:[#allocation15 + $0x20] sm:$0xf] %v669
      %702 = vst [vmem:[#allocation15 + $0x24] sm:$0xf] %v670
      %703 = vst [vmem:[#allocation15 + $0x28] sm:$0xf] %v671
      %704 = vst [vmem:[#allocation15 + $0x2c] sm:$0xf] %v672
      %705 = vst [vmem:[#allocation15 + $0x30] sm:$0xf] %v673
      %706 = vst [vmem:[#allocation15 + $0x34] sm:$0xf] %v674
      %707 = vst [vmem:[#allocation15 + $0x38] sm:$0xf] %v675
      %708 = vst [vmem:[#allocation15 + $0x3c] sm:$0xf] %v676
      %v709 = vld [vmem:[#allocation11] sm:$0xf]
      %v710 = vld [vmem:[#allocation11 + $0x4] sm:$0xf]
      %v711 = vld [vmem:[#allocation11 + $0x8] sm:$0xf]
      %v712 = vld [vmem:[#allocation11 + $0xc] sm:$0xf]
      %v713 = vld [vmem:[#allocation11 + $0x10] sm:$0xf]
      %v714 = vld [vmem:[#allocation11 + $0x14] sm:$0xf]
      %v715 = vld [vmem:[#allocation11 + $0x18] sm:$0xf]
      %v716 = vld [vmem:[#allocation11 + $0x1c] sm:$0xf]
      %v717 = vld [vmem:[#allocation11 + $0x20] sm:$0xf]
      %v718 = vld [vmem:[#allocation11 + $0x24] sm:$0xf]
      %v719 = vld [vmem:[#allocation11 + $0x28] sm:$0xf]
      %v720 = vld [vmem:[#allocation11 + $0x2c] sm:$0xf]
      %v721 = vld [vmem:[#allocation11 + $0x30] sm:$0xf]
      %v722 = vld [vmem:[#allocation11 + $0x34] sm:$0xf]
      %v723 = vld [vmem:[#allocation11 + $0x38] sm:$0xf]
      %v724 = vld [vmem:[#allocation11 + $0x3c] sm:$0xf]
      %v725 = vld [vmem:[#allocation12] sm:$0x1]
      %v727 = vlaneseq
      %v728 = vshrl.u32 %v727, 7
      %v729 = vsub.s32 0, %v728
      %v730 = vrot.slane %v725, %v729
      %v748 = vunpack.c.l.b16 %v709
      %v749 = vunpack.c.l.b16 %v710
      %v750 = vunpack.c.l.b16 %v711
      %v751 = vunpack.c.l.b16 %v712
      %v752 = vunpack.c.l.b16 %v713
      %v753 = vunpack.c.l.b16 %v714
      %v754 = vunpack.c.l.b16 %v715
      %v755 = vunpack.c.l.b16 %v716
      %v756 = vunpack.c.l.b16 %v717
      %v757 = vunpack.c.l.b16 %v718
      %v758 = vunpack.c.l.b16 %v719
      %v759 = vunpack.c.l.b16 %v720
      %v760 = vunpack.c.l.b16 %v721
      %v761 = vunpack.c.l.b16 %v722
      %v762 = vunpack.c.l.b16 %v723
      %v763 = vunpack.c.l.b16 %v724
      %v764 = vpack.c.b16 %v749, %v748
      %v765 = vpack.c.b16 %v751, %v750
      %v766 = vpack.c.b16 %v753, %v752
      %v767 = vpack.c.b16 %v755, %v754
      %v768 = vpack.c.b16 %v757, %v756
      %v769 = vpack.c.b16 %v759, %v758
      %v770 = vpack.c.b16 %v761, %v760
      %v771 = vpack.c.b16 %v763, %v762
      %780 = vmatprep.subr.bf16.mxu0 0
      %781 = vmatpush1.bf16.msra.mxu0 %v764
      %782 = vmatprep.subr.bf16.mxu0 0
      %783 = vmatpush1.bf16.msra.mxu0 %v765
      %784 = vmatprep.subr.bf16.mxu0 0
      %785 = vmatpush1.bf16.msra.mxu0 %v766
      %786 = vmatprep.subr.bf16.mxu0 0
      %787 = vmatpush1.bf16.msra.mxu0 %v767
      %788 = vmatprep.subr.bf16.mxu0 0
      %789 = vmatpush1.bf16.msra.mxu0 %v768
      %790 = vmatprep.subr.bf16.mxu0 0
      %791 = vmatpush1.bf16.msra.mxu0 %v769
      %792 = vmatprep.subr.bf16.mxu0 0
      %793 = vmatpush1.bf16.msra.mxu0 %v770
      %794 = vmatprep.subr.bf16.mxu0 0
      %795 = vmatpush1.bf16.msra.mxu0 %v771
      %796 = vmatprep.subr.bf16.mxu0 0
      %797 = vmatpush1.bf16.msra.mxu0 0
      %798 = vmatprep.subr.bf16.mxu0 0
      %799 = vmatpush1.bf16.msra.mxu0 0
      %800 = vmatprep.subr.bf16.mxu0 0
      %801 = vmatpush1.bf16.msra.mxu0 0
      %802 = vmatprep.subr.bf16.mxu0 0
      %803 = vmatpush1.bf16.msra.mxu0 0
      %804 = vmatprep.subr.bf16.mxu0 0
      %805 = vmatpush1.bf16.msra.mxu0 0
      %806 = vmatprep.subr.bf16.mxu0 0
      %807 = vmatpush1.bf16.msra.mxu0 0
      %808 = vmatprep.subr.bf16.mxu0 0
      %809 = vmatpush1.bf16.msra.mxu0 0
      %810 = vmatprep.subr.bf16.mxu0 0
      %811 = vmatpush1.bf16.msra.mxu0 0
      %812 = vmatprep.mubr.bf16.mxu0 0
      %813 = vmatmul.mubr.bf16.gmra.mrb[0].mxu0 %v629
      %v814 = vpop.f32.mrb[0].mxu0
      %v815 = vadd.f32 %v730, %v814
      %v816 = vpop.f32.mrb[0].mxu0
      %v817 = vpop.f32.mrb[0].mxu0
      %v818 = vadd.f32 %v730, %v817
      %v819 = vpop.f32.mrb[0].mxu0
      %820 = vmatprep.mubr.bf16.mxu0 0
      %821 = vmatmul.mubr.bf16.gmra.mrb[0].mxu0 %v630
      %v822 = vpop.f32.mrb[0].mxu0
      %v823 = vadd.f32 %v730, %v822
      %v824 = vpop.f32.mrb[0].mxu0
      %v825 = vpop.f32.mrb[0].mxu0
      %v826 = vadd.f32 %v730, %v825
      %v827 = vpop.f32.mrb[0].mxu0
      %828 = vmatprep.mubr.bf16.mxu0 0
      %829 = vmatmul.mubr.bf16.gmra.mrb[0].mxu0 %v631
      %v830 = vpop.f32.mrb[0].mxu0
      %v831 = vadd.f32 %v730, %v830
      %v832 = vpop.f32.mrb[0].mxu0
      %v833 = vpop.f32.mrb[0].mxu0
      %v834 = vadd.f32 %v730, %v833
      %v835 = vpop.f32.mrb[0].mxu0
      %836 = vmatprep.mubr.bf16.mxu0 0
      %837 = vmatmul.mubr.bf16.gmra.mrb[0].mxu0 %v632
      %v838 = vpop.f32.mrb[0].mxu0
      %v839 = vadd.f32 %v730, %v838
      %v840 = vpop.f32.mrb[0].mxu0
      %v841 = vpop.f32.mrb[0].mxu0
      %v842 = vadd.f32 %v730, %v841
      %v843 = vpop.f32.mrb[0].mxu0
      %844 = vmatprep.mubr.bf16.mxu0 0
      %845 = vmatmul.mubr.bf16.gmra.mrb[0].mxu0 %v633
      %v846 = vpop.f32.mrb[0].mxu0
      %v847 = vadd.f32 %v730, %v846
      %v848 = vpop.f32.mrb[0].mxu0
      %v849 = vpop.f32.mrb[0].mxu0
      %v850 = vadd.f32 %v730, %v849
      %v851 = vpop.f32.mrb[0].mxu0
      %852 = vmatprep.mubr.bf16.mxu0 0
      %853 = vmatmul.mubr.bf16.gmra.mrb[0].mxu0 %v634
      %v854 = vpop.f32.mrb[0].mxu0
      %v855 = vadd.f32 %v730, %v854
      %v856 = vpop.f32.mrb[0].mxu0
      %v857 = vpop.f32.mrb[0].mxu0
      %v858 = vadd.f32 %v730, %v857
      %v859 = vpop.f32.mrb[0].mxu0
      %860 = vmatprep.mubr.bf16.mxu0 0
      %861 = vmatmul.mubr.bf16.gmra.mrb[0].mxu0 %v635
      %v862 = vpop.f32.mrb[0].mxu0
      %v863 = vadd.f32 %v730, %v862
      %v864 = vpop.f32.mrb[0].mxu0
      %v865 = vpop.f32.mrb[0].mxu0
      %v866 = vadd.f32 %v730, %v865
      %v867 = vpop.f32.mrb[0].mxu0
      %868 = vmatprep.mubr.bf16.mxu0 0
      %869 = vmatmul.mubr.bf16.gmra.mrb[0].mxu0 %v636
      %v870 = vpop.f32.mrb[0].mxu0
      %v871 = vadd.f32 %v730, %v870
      %v872 = vpop.f32.mrb[0].mxu0
      %v873 = vpop.f32.mrb[0].mxu0
      %v874 = vadd.f32 %v730, %v873
      %v875 = vpop.f32.mrb[0].mxu0
      %876 = vdwg.mxu0
      %877 = vmax.xlane.f32.xlu0 %v815
      %v878 = vpop.xlane.xlu0 %877
      %879 = vmax.xlane.f32.xlu0 %v818
      %v880 = vpop.xlane.xlu0 %879
      %881 = vmax.xlane.f32.xlu0 %v823
      %v882 = vpop.xlane.xlu0 %881
      %883 = vmax.xlane.f32.xlu0 %v826
      %v884 = vpop.xlane.xlu0 %883
      %885 = vmax.xlane.f32.xlu0 %v831
      %v886 = vpop.xlane.xlu0 %885
      %887 = vmax.xlane.f32.xlu0 %v834
      %v888 = vpop.xlane.xlu0 %887
      %889 = vmax.xlane.f32.xlu0 %v839
      %v890 = vpop.xlane.xlu0 %889
      %891 = vmax.xlane.f32.xlu0 %v842
      %v892 = vpop.xlane.xlu0 %891
      %893 = vmax.xlane.f32.xlu0 %v847
      %v894 = vpop.xlane.xlu0 %893
      %895 = vmax.xlane.f32.xlu0 %v850
      %v896 = vpop.xlane.xlu0 %895
      %897 = vmax.xlane.f32.xlu0 %v855
      %v898 = vpop.xlane.xlu0 %897
      %899 = vmax.xlane.f32.xlu0 %v858
      %v900 = vpop.xlane.xlu0 %899
      %901 = vmax.xlane.f32.xlu0 %v863
      %v902 = vpop.xlane.xlu0 %901
      %903 = vmax.xlane.f32.xlu0 %v866
      %v904 = vpop.xlane.xlu0 %903
      %905 = vmax.xlane.f32.xlu0 %v871
      %v906 = vpop.xlane.xlu0 %905
      %907 = vmax.xlane.f32.xlu0 %v874
      %v908 = vpop.xlane.xlu0 %907
      %v909 = vsub.f32 %v815, %v878
      %v910 = vsub.f32 %v818, %v880
      %v911 = vsub.f32 %v823, %v882
      %v912 = vsub.f32 %v826, %v884
      %v913 = vsub.f32 %v831, %v886
      %v914 = vsub.f32 %v834, %v888
      %v915 = vsub.f32 %v839, %v890
      %v916 = vsub.f32 %v842, %v892
      %v917 = vsub.f32 %v847, %v894
      %v918 = vsub.f32 %v850, %v896
      %v919 = vsub.f32 %v855, %v898
      %v920 = vsub.f32 %v858, %v900
      %v921 = vsub.f32 %v863, %v902
      %v922 = vsub.f32 %v866, %v904
      %v923 = vsub.f32 %v871, %v906
      %v924 = vsub.f32 %v874, %v908
      %v925 = vmul.f32 %v909, 1.442695
      %v926 = vpow.pop %v925
      %v927 = vmul.f32 %v910, 1.442695
      %v928 = vpow.pop %v927
      %v929 = vmul.f32 %v911, 1.442695
      %v930 = vpow.pop %v929
      %v931 = vmul.f32 %v912, 1.442695
      %v932 = vpow.pop %v931
      %v933 = vmul.f32 %v913, 1.442695
      %v934 = vpow.pop %v933
      %v935 = vmul.f32 %v914, 1.442695
      %v936 = vpow.pop %v935
      %v937 = vmul.f32 %v915, 1.442695
      %v938 = vpow.pop %v937
      %v939 = vmul.f32 %v916, 1.442695
      %v940 = vpow.pop %v939
      %v941 = vmul.f32 %v917, 1.442695
      %v942 = vpow.pop %v941
      %v943 = vmul.f32 %v918, 1.442695
      %v944 = vpow.pop %v943
      %v945 = vmul.f32 %v919, 1.442695
      %v946 = vpow.pop %v945
      %v947 = vmul.f32 %v920, 1.442695
      %v948 = vpow.pop %v947
      %v949 = vmul.f32 %v921, 1.442695
      %v950 = vpow.pop %v949
      %v951 = vmul.f32 %v922, 1.442695
      %v952 = vpow.pop %v951
      %v953 = vmul.f32 %v923, 1.442695
      %v954 = vpow.pop %v953
      %v955 = vmul.f32 %v924, 1.442695
      %v956 = vpow.pop %v955
      %957 = vadd.xlane.f32.xlu0 %v926
      %v958 = vpop.xlane.xlu0 %957
      %959 = vadd.xlane.f32.xlu0 %v928
      %v960 = vpop.xlane.xlu0 %959
      %961 = vadd.xlane.f32.xlu0 %v930
      %v962 = vpop.xlane.xlu0 %961
      %963 = vadd.xlane.f32.xlu0 %v932
      %v964 = vpop.xlane.xlu0 %963
      %965 = vadd.xlane.f32.xlu0 %v934
      %v966 = vpop.xlane.xlu0 %965
      %967 = vadd.xlane.f32.xlu0 %v936
      %v968 = vpop.xlane.xlu0 %967
      %969 = vadd.xlane.f32.xlu0 %v938
      %v970 = vpop.xlane.xlu0 %969
      %971 = vadd.xlane.f32.xlu0 %v940
      %v972 = vpop.xlane.xlu0 %971
      %973 = vadd.xlane.f32.xlu0 %v942
      %v974 = vpop.xlane.xlu0 %973
      %975 = vadd.xlane.f32.xlu0 %v944
      %v976 = vpop.xlane.xlu0 %975
      %977 = vadd.xlane.f32.xlu0 %v946
      %v978 = vpop.xlane.xlu0 %977
      %979 = vadd.xlane.f32.xlu0 %v948
      %v980 = vpop.xlane.xlu0 %979
      %981 = vadd.xlane.f32.xlu0 %v950
      %v982 = vpop.xlane.xlu0 %981
      %983 = vadd.xlane.f32.xlu0 %v952
      %v984 = vpop.xlane.xlu0 %983
      %985 = vadd.xlane.f32.xlu0 %v954
      %v986 = vpop.xlane.xlu0 %985
      %987 = vadd.xlane.f32.xlu0 %v956
      %v988 = vpop.xlane.xlu0 %987
      %v989 = vrcp.pop %v958
      %v990 = vrcp.pop %v960
      %v991 = vrcp.pop %v962
      %v992 = vrcp.pop %v964
      %v993 = vrcp.pop %v966
      %v994 = vrcp.pop %v968
      %v995 = vrcp.pop %v970
      %v996 = vrcp.pop %v972
      %v997 = vrcp.pop %v974
      %v998 = vrcp.pop %v976
      %v999 = vrcp.pop %v978
      %v1000 = vrcp.pop %v980
      %v1001 = vrcp.pop %v982
      %v1002 = vrcp.pop %v984
      %v1003 = vrcp.pop %v986
      %v1004 = vrcp.pop %v988
      %v1005 = vmul.f32 %v926, %v989
      %v1006 = vmul.f32 %v928, %v990
      %v1007 = vmul.f32 %v930, %v991
      %v1008 = vmul.f32 %v932, %v992
      %v1009 = vmul.f32 %v934, %v993
      %v1010 = vmul.f32 %v936, %v994
      %v1011 = vmul.f32 %v938, %v995
      %v1012 = vmul.f32 %v940, %v996
      %v1013 = vmul.f32 %v942, %v997
      %v1014 = vmul.f32 %v944, %v998
      %v1015 = vmul.f32 %v946, %v999
      %v1016 = vmul.f32 %v948, %v1000
      %v1017 = vmul.f32 %v950, %v1001
      %v1018 = vmul.f32 %v952, %v1002
      %v1019 = vmul.f32 %v954, %v1003
      %v1020 = vmul.f32 %v956, %v1004
      %v1021 = vld [vmem:[#allocation14] sm:$0xff]
      %1022 = vmatprep.subr.mxu0 0.0
      %1023 = vmatpush1.msra.mxu0 %v1005
      %1024 = vmatprep.subr.mxu0 0.0
      %1025 = vmatpush1.msra.mxu0 %v1006
      %1026 = vmatprep.subr.mxu0 0.0
      %1027 = vmatpush1.msra.mxu0 %v1007
      %1028 = vmatprep.subr.mxu0 0.0
      %1029 = vmatpush1.msra.mxu0 %v1008
      %1030 = vmatprep.subr.mxu0 0.0
      %1031 = vmatpush1.msra.mxu0 %v1009
      %1032 = vmatprep.subr.mxu0 0.0
      %1033 = vmatpush1.msra.mxu0 %v1010
      %1034 = vmatprep.subr.mxu0 0.0
      %1035 = vmatpush1.msra.mxu0 %v1011
      %1036 = vmatprep.subr.mxu0 0.0
      %1037 = vmatpush1.msra.mxu0 %v1012
      %1038 = vmatprep.subr.mxu0 0.0
      %1039 = vmatpush1.msra.mxu0 %v1013
      %1040 = vmatprep.subr.mxu0 0.0
      %1041 = vmatpush1.msra.mxu0 %v1014
      %1042 = vmatprep.subr.mxu0 0.0
      %1043 = vmatpush1.msra.mxu0 %v1015
      %1044 = vmatprep.subr.mxu0 0.0
      %1045 = vmatpush1.msra.mxu0 %v1016
      %1046 = vmatprep.subr.mxu0 0.0
      %1047 = vmatpush1.msra.mxu0 %v1017
      %1048 = vmatprep.subr.mxu0 0.0
      %1049 = vmatpush1.msra.mxu0 %v1018
      %1050 = vmatprep.subr.mxu0 0.0
      %1051 = vmatpush1.msra.mxu0 %v1019
      %1052 = vmatprep.subr.mxu0 0.0
      %1053 = vmatpush1.msra.mxu0 %v1020
      %1054 = vmatprep.subr.mxu0 0.0
      %1055 = vmatpush1.msra.mxu0 0.0
      %1056 = vmatprep.subr.mxu0 0.0
      %1057 = vmatpush1.msra.mxu0 0.0
      %1058 = vmatprep.subr.mxu0 0.0
      %1059 = vmatpush1.msra.mxu0 0.0
      %1060 = vmatprep.subr.mxu0 0.0
      %1061 = vmatpush1.msra.mxu0 0.0
      %1062 = vmatprep.subr.mxu0 0.0
      %1063 = vmatpush1.msra.mxu0 0.0
      %1064 = vmatprep.subr.mxu0 0.0
      %1065 = vmatpush1.msra.mxu0 0.0
      %1066 = vmatprep.subr.mxu0 0.0
      %1067 = vmatpush1.msra.mxu0 0.0
      %1068 = vmatprep.subr.mxu0 0.0
      %1069 = vmatpush1.msra.mxu0 0.0
      %1070 = vmatprep.subr.mxu0 0.0
      %1071 = vmatpush1.msra.mxu0 0.0
      %1072 = vmatprep.subr.mxu0 0.0
      %1073 = vmatpush1.msra.mxu0 0.0
      %1074 = vmatprep.subr.mxu0 0.0
      %1075 = vmatpush1.msra.mxu0 0.0
      %1076 = vmatprep.subr.mxu0 0.0
      %1077 = vmatpush1.msra.mxu0 0.0
      %1078 = vmatprep.subr.mxu0 0.0
      %1079 = vmatpush1.msra.mxu0 0.0
      %1080 = vmatprep.subr.mxu0 0.0
      %1081 = vmatpush1.msra.mxu0 0.0
      %1082 = vmatprep.subr.mxu0 0.0
      %1083 = vmatpush1.msra.mxu0 0.0
      %1084 = vmatprep.subr.mxu0 0.0
      %1085 = vmatpush1.msra.mxu0 0.0
      %1086 = vmatprep.mubr.f32.mxu0 0.0
      %1087 = vmatmul.mubr.f32.gmra.mrb[0].mxu0 %v1021
      %v1088 = vpop.f32.mrb[0].mxu0
      %v1089 = vadd.f32 0.0, %v1088
      %v1090 = vpop.f32.mrb[0].mxu0
      %1091 = vdwg.mxu0
      %1092 = vst [vmem:[#allocation16] sm:$0xff] %v1089
    $region65: #{neural_fingerprint_forward.2} parent=1 // pred_fallthru
      _
    // Predicated region
    $region66: #{neural_fingerprint_forward.2} parent=1 // pred_check
      _
    $region67: #{neural_fingerprint_forward.2} parent=1 // pred_check_branch
      %1094 = sbr.rel (0) target = $region69
    $region68: #{neural_fingerprint_forward.2} parent=1 // pred_region
      %s1096 = ssub.s32 1024, 1024
      %1097 = vsyncadd [#allocation5], %s1096
      %s1098 = sshll.u32 [#allocation15], 4
      %s1099 = int_to_ptr.vmem [resolvable:$true] %s1098
      %1104 = dma.vmem_to_hbm [thread:$0]  %s1099, 1024, %s7, [#allocation5], 64, 64, 4
    $region69: #{neural_fingerprint_forward.2} parent=1 // pred_fallthru
      _
    // Predicated region
    $region70: #{neural_fingerprint_forward.2} parent=1 // pred_check
      _
    $region71: #{neural_fingerprint_forward.2} parent=1 // pred_check_branch
      %1106 = sbr.rel (0) target = $region73
    $region72: #{neural_fingerprint_forward.2} parent=1 // pred_region
      %s1108 = ssub.s32 128, 128
      %1109 = vsyncadd [#allocation17], %s1108
      %s1111 = sshll.u32 [#allocation16], 4
      %s1112 = int_to_ptr.vmem [resolvable:$true] %s1111
      %1114 = dma.vmem_to_hbm [thread:$0]  %s1112, 128, %s8, [#allocation17]
    $region73: #{neural_fingerprint_forward.2} parent=1 // pred_fallthru
      _
    // Predicated region
    $region74: #{neural_fingerprint_forward.2} parent=1 // pred_check
      _
    $region75: #{neural_fingerprint_forward.2} parent=1 // pred_check_branch
      %1116 = sbr.rel (0) target = $region77
    $region76: #{neural_fingerprint_forward.2} parent=1 // pred_region
      %1117 = dma.done [#allocation5], 1024
    $region77: #{neural_fingerprint_forward.2} parent=1 // pred_fallthru
      _
    // Predicated region
    $region78: #{neural_fingerprint_forward.2} parent=1 // pred_check
      _
    $region79: #{neural_fingerprint_forward.2} parent=1 // pred_check_branch
      %1119 = sbr.rel (0) target = $region81
    $region80: #{neural_fingerprint_forward.2} parent=1 // pred_region
      %1120 = dma.done [#allocation17], 128
    $region81: #{neural_fingerprint_forward.2} parent=1 // pred_fallthru
      _
    %1121 = vsyncpa [#allocation4], 1
    %1122 = vsyncpa [#allocation7], 1
    %1123 = vsyncpa [#allocation10], 1
    %1124 = vsyncpa [#allocation13], 1
    %1125 = vsyncpa [#allocation5], 1
    %1126 = vsyncpa [#allocation17], 1

</llo_original>
